<compile_context>
chip_gen: v5e
topology: v5e:2x2
jax: 0.10.0
libtpu: 0.0.40
codegen_flags: <defaults>
</compile_context>

<pallas_src>
import jax
import jax.numpy as jnp
from jax.experimental import pallas as pl
from jax.experimental.pallas import tpu as pltpu


def _encode_mean_kernel(xf_ref, mu_ref, w1x_ref, w1m_ref, b1_ref,
                        w2_ref, b2_ref, z_ref):
    # Cast activations to bf16 for the MXU; accumulate in f32.
    xf = xf_ref[...].astype(jnp.bfloat16)
    mu = mu_ref[...].astype(jnp.bfloat16)

    # hidden = relu(b1 + x_flat @ W1x + mu @ W1mu)   (split-K, bias as acc init)
    h = b1_ref[...]
    h = h + jnp.dot(xf, w1x_ref[...], preferred_element_type=jnp.float32)
    h = h + jnp.dot(mu, w1m_ref[...], preferred_element_type=jnp.float32)
    h = jnp.maximum(h, 0.0).astype(jnp.bfloat16)

    # z = b2 + hidden @ W2
    z = b2_ref[...] + jnp.dot(h, w2_ref[...], preferred_element_type=jnp.float32)
    z_ref[...] = z.astype(z_ref.dtype)


def _round_up(x, m):
    return ((x + m - 1) // m) * m


def prepare_encode_mean_params(w1, b1, w2, b2, *, dim_xw):
    """One-time parameter prep (hoisted out of the per-call hot path).

    w1: [dim_xw + dim_mu, hidden], b1: [hidden], w2: [hidden, dim_z], b2: [dim_z]
    """
    hidden = w1.shape[-1]
    dim_z = w2.shape[-1]
    return dict(
        w1_x=w1[:dim_xw, :].astype(jnp.bfloat16),      # [dim_xw, hidden]
        w1_m=w1[dim_xw:, :].astype(jnp.bfloat16),      # [dim_mu, hidden]
        b1=b1.reshape(1, hidden).astype(jnp.float32),  # [1, hidden]
        w2=w2.astype(jnp.bfloat16),                    # [hidden, dim_z]
        b2=b2.reshape(1, dim_z).astype(jnp.float32),   # [1, dim_z]
    )


def encode_mean_net(mu, x_win, params, *, block_b=1024):
    """mu: [B, dim_mu], x_win: [B, n_win, dim_x]; params from prepare_encode_mean_params."""
    B = mu.shape[0]
    dim_mu = mu.shape[-1]
    x_flat = x_win.reshape(B, -1)                      # flatten(-2)
    dim_xw = x_flat.shape[-1]

    w1_x, w1_m, b1 = params["w1_x"], params["w1_m"], params["b1"]
    w2, b2 = params["w2"], params["b2"]
    hidden = w1_x.shape[-1]
    dim_z = w2.shape[-1]

    # Batch tile: multiple of 16 (bf16 sublane packing), large (kernel is
    # HBM-bandwidth bound). When the batch allows, cap the tile so the grid
    # has >= 2 parallel steps for v7x's two TensorCores.
    tb = min(block_b, _round_up(B, 16))
    if B >= 32:
        tb = min(tb, _round_up(-(-B // 2), 16))
    b_pad = _round_up(B, tb)
    if b_pad != B:
        x_flat = jnp.pad(x_flat, ((0, b_pad - B), (0, 0)))
        mu_in = jnp.pad(mu, ((0, b_pad - B), (0, 0)))
    else:
        mu_in = mu
    grid = (b_pad // tb,)

    # Advisory cost hint for XLA scheduling around the custom call.
    act_bytes = (x_flat.size * x_flat.dtype.itemsize
                 + mu_in.size * mu_in.dtype.itemsize)
    w_bytes = sum(a.size * a.dtype.itemsize for a in (w1_x, w1_m, b1, w2, b2))
    out_bytes = b_pad * dim_z * 4
    cost = pl.CostEstimate(
        flops=2 * b_pad * ((dim_xw + dim_mu) * hidden + hidden * dim_z),
        transcendentals=0,
        bytes_accessed=act_bytes + w_bytes + out_bytes)

    act_spec = lambda n: pl.BlockSpec((tb, n), lambda i: (i, 0))
    fix_spec = lambda shape: pl.BlockSpec(shape, lambda i: (0, 0))

    z_full = pl.pallas_call(
        _encode_mean_kernel,
        out_shape=jax.ShapeDtypeStruct((b_pad, dim_z), jnp.float32),
        grid=grid,
        in_specs=[
            act_spec(dim_xw),                 # x_flat  [tb, dim_xw]
            act_spec(dim_mu),                 # mu      [tb, dim_mu]
            fix_spec((dim_xw, hidden)),       # W1x (VMEM-resident across grid)
            fix_spec((dim_mu, hidden)),       # W1mu
            fix_spec((1, hidden)),            # b1
            fix_spec((hidden, dim_z)),        # W2
            fix_spec((1, dim_z)),             # b2
        ],
        out_specs=pl.BlockSpec((tb, dim_z), lambda i: (i, 0)),
        compiler_params=pltpu.CompilerParams(
            dimension_semantics=("parallel",)),
        cost_estimate=cost,
    )(x_flat, mu_in, w1_x, w1_m, b1, w2, b2)

    # Strip batch-row padding only (feature dim is already exact).
    return z_full if b_pad == B else z_full[:B]


if __name__ == "__main__":
    # Config (small, consistent with the module):
    #   shape_x = (4, 4) -> dim_x = 16, n_win = 8, dim_mu = 32, dim_z = 32
    B = 2
    n_win = 8
    shape_x = (4, 4)
    dim_x = shape_x[0] * shape_x[1]
    dim_mu = 32
    dim_z = 32
    hidden = 256
    dim_in = dim_x * n_win + dim_mu  # 128 + 32 = 160

    key = jax.random.PRNGKey(0)
    k_mu, k_x, k_w1, k_b1, k_w2, k_b2 = jax.random.split(key, 6)

    mu = jax.random.normal(k_mu, (B, dim_mu), dtype=jnp.float32)
    # x_win shaped [B, n_win, dim_x] so that flatten(-2) gives [B, n_win*dim_x]
    x_win = jax.random.normal(k_x, (B, n_win, dim_x), dtype=jnp.float32)

    # Deterministic parameter init (same spirit as nn.Linear default: uniform).
    def linear_init(kw, kb, fan_in, fan_out):
        bound = 1.0 / jnp.sqrt(float(fan_in))
        w = jax.random.uniform(kw, (fan_in, fan_out), jnp.float32, -bound, bound)
        b = jax.random.uniform(kb, (fan_out,), jnp.float32, -bound, bound)
        return w, b

    w1, b1 = linear_init(k_w1, k_b1, dim_in, hidden)
    w2, b2 = linear_init(k_w2, k_b2, hidden, dim_z)

    # One-time weight prep (hoisted out of the hot path), then the kernel call.
    params = jax.tree_util.tree_map(
        jax.block_until_ready,
        prepare_encode_mean_params(w1, b1, w2, b2, dim_xw=dim_x * n_win))
    z = encode_mean_net(mu, x_win, params)
    jax.block_until_ready(z)

    # Pure-JAX f32 reference (tolerance loosened for bf16 MXU operands).
    x_mu_ref = jnp.concatenate([x_win.reshape(B, -1), mu], axis=-1)
    z_ref = jnp.maximum(x_mu_ref @ w1 + b1, 0.0) @ w2 + b2
    assert z.shape == (B, dim_z)
    assert jnp.allclose(z, z_ref, atol=2e-2, rtol=2e-2)

    print("KERNEL_OK")
</pallas_src>

<mosaic_0001>
module attributes {stable_mosaic.version = 11 : i64} {
  func.func @_encode_mean_kernel(%arg0: i32, %arg1: memref<16x128xf32, #tpu.memory_space<vmem>>, %arg2: memref<16x32xf32, #tpu.memory_space<vmem>>, %arg3: memref<128x256xbf16, #tpu.memory_space<vmem>>, %arg4: memref<32x256xbf16, #tpu.memory_space<vmem>>, %arg5: memref<1x256xf32, #tpu.memory_space<vmem>>, %arg6: memref<256x32xbf16, #tpu.memory_space<vmem>>, %arg7: memref<1x32xf32, #tpu.memory_space<vmem>>, %arg8: memref<16x32xf32, #tpu.memory_space<vmem>>) attributes {dimension_semantics = [#tpu.dimension_semantics<parallel>], iteration_bounds = array<i64: 1>, scalar_prefetch = 0 : i64, scratch_operands = 0 : i64, tpu.core_type = #tpu.core_type<tc>, window_params = [{transform_indices = @transform_0, window_bounds = array<i64: 16, 128>}, {transform_indices = @transform_1, window_bounds = array<i64: 16, 32>}, {pipeline_mode = #tpu.pipeline_mode<synchronous>, transform_indices = @transform_2, window_bounds = array<i64: 128, 256>}, {pipeline_mode = #tpu.pipeline_mode<synchronous>, transform_indices = @transform_3, window_bounds = array<i64: 32, 256>}, {pipeline_mode = #tpu.pipeline_mode<synchronous>, transform_indices = @transform_4, window_bounds = array<i64: 1, 256>}, {pipeline_mode = #tpu.pipeline_mode<synchronous>, transform_indices = @transform_5, window_bounds = array<i64: 256, 32>}, {pipeline_mode = #tpu.pipeline_mode<synchronous>, transform_indices = @transform_6, window_bounds = array<i64: 1, 32>}, {transform_indices = @transform_7, window_bounds = array<i64: 16, 32>}]} {
    %c0 = arith.constant 0 : index
    %c0_0 = arith.constant 0 : index
    %0 = vector.load %arg1[%c0, %c0_0] : memref<16x128xf32, #tpu.memory_space<vmem>>, vector<16x128xf32>
    %1 = arith.truncf %0 : vector<16x128xf32> to vector<16x128xbf16>
    %c0_1 = arith.constant 0 : index
    %c0_2 = arith.constant 0 : index
    %2 = vector.load %arg2[%c0_1, %c0_2] : memref<16x32xf32, #tpu.memory_space<vmem>>, vector<16x32xf32>
    %3 = arith.truncf %2 : vector<16x32xf32> to vector<16x32xbf16>
    %c0_3 = arith.constant 0 : index
    %c0_4 = arith.constant 0 : index
    %4 = vector.load %arg5[%c0_3, %c0_4] : memref<1x256xf32, #tpu.memory_space<vmem>>, vector<1x256xf32>
    %c0_5 = arith.constant 0 : index
    %c0_6 = arith.constant 0 : index
    %5 = vector.load %arg3[%c0_5, %c0_6] : memref<128x256xbf16, #tpu.memory_space<vmem>>, vector<128x256xbf16>
    %cst = arith.constant dense<0.000000e+00> : vector<16x256xf32>
    %6 = tpu.matmul %1, %5, %cst {dimension_numbers = #tpu.dot_dimension_numbers<[1], [0], [0], [1], [0, 0, 1, 1], [], []>} : vector<16x128xbf16>, vector<128x256xbf16>, vector<16x256xf32> -> vector<16x256xf32>
    %7 = vector.broadcast %4 : vector<1x256xf32> to vector<16x256xf32>
    %8 = arith.addf %7, %6 : vector<16x256xf32>
    %c0_7 = arith.constant 0 : index
    %c0_8 = arith.constant 0 : index
    %9 = vector.load %arg4[%c0_7, %c0_8] : memref<32x256xbf16, #tpu.memory_space<vmem>>, vector<32x256xbf16>
    %cst_9 = arith.constant dense<0.000000e+00> : vector<16x256xf32>
    %10 = tpu.matmul %3, %9, %cst_9 {dimension_numbers = #tpu.dot_dimension_numbers<[1], [0], [0], [1], [0, 0, 1, 1], [], []>} : vector<16x32xbf16>, vector<32x256xbf16>, vector<16x256xf32> -> vector<16x256xf32>
    %11 = arith.addf %8, %10 : vector<16x256xf32>
    %cst_10 = arith.constant 0.000000e+00 : f32
    %12 = vector.broadcast %cst_10 : f32 to vector<16x256xf32>
    %13 = arith.maximumf %11, %12 : vector<16x256xf32>
    %14 = arith.truncf %13 : vector<16x256xf32> to vector<16x256xbf16>
    %c0_11 = arith.constant 0 : index
    %c0_12 = arith.constant 0 : index
    %15 = vector.load %arg7[%c0_11, %c0_12] : memref<1x32xf32, #tpu.memory_space<vmem>>, vector<1x32xf32>
    %c0_13 = arith.constant 0 : index
    %c0_14 = arith.constant 0 : index
    %16 = vector.load %arg6[%c0_13, %c0_14] : memref<256x32xbf16, #tpu.memory_space<vmem>>, vector<256x32xbf16>
    %cst_15 = arith.constant dense<0.000000e+00> : vector<16x32xf32>
    %17 = tpu.matmul %14, %16, %cst_15 {dimension_numbers = #tpu.dot_dimension_numbers<[1], [0], [0], [1], [0, 0, 1, 1], [], []>} : vector<16x256xbf16>, vector<256x32xbf16>, vector<16x32xf32> -> vector<16x32xf32>
    %18 = vector.broadcast %15 : vector<1x32xf32> to vector<16x32xf32>
    %19 = arith.addf %18, %17 : vector<16x32xf32>
    %c0_16 = arith.constant 0 : index
    %c0_17 = arith.constant 0 : index
    %20 = vector.load %arg8[%c0_16, %c0_17] : memref<16x32xf32, #tpu.memory_space<vmem>>, vector<16x32xf32>
    tpu.vector_store %arg8[%c0_16, %c0_17], %19 {strides = array<i32>} : memref<16x32xf32, #tpu.memory_space<vmem>>, vector<16x32xf32>,
    return
  }
  func.func @transform_0(%arg0: i32) -> (i32, i32) {
    %c0_i32 = arith.constant 0 : i32
    %c0_i32_0 = arith.constant 0 : i32
    return %arg0, %c0_i32 : i32, i32
  }
  func.func @transform_1(%arg0: i32) -> (i32, i32) {
    %c0_i32 = arith.constant 0 : i32
    %c0_i32_0 = arith.constant 0 : i32
    return %arg0, %c0_i32 : i32, i32
  }
  func.func @transform_2(%arg0: i32) -> (i32, i32) {
    %c0_i32 = arith.constant 0 : i32
    %c0_i32_0 = arith.constant 0 : i32
    %c0_i32_1 = arith.constant 0 : i32
    return %c0_i32, %c0_i32_0 : i32, i32
  }
  func.func @transform_3(%arg0: i32) -> (i32, i32) {
    %c0_i32 = arith.constant 0 : i32
    %c0_i32_0 = arith.constant 0 : i32
    %c0_i32_1 = arith.constant 0 : i32
    return %c0_i32, %c0_i32_0 : i32, i32
  }
  func.func @transform_4(%arg0: i32) -> (i32, i32) {
    %c0_i32 = arith.constant 0 : i32
    %c0_i32_0 = arith.constant 0 : i32
    %c0_i32_1 = arith.constant 0 : i32
    return %c0_i32, %c0_i32_0 : i32, i32
  }
  func.func @transform_5(%arg0: i32) -> (i32, i32) {
    %c0_i32 = arith.constant 0 : i32
    %c0_i32_0 = arith.constant 0 : i32
    %c0_i32_1 = arith.constant 0 : i32
    return %c0_i32, %c0_i32_0 : i32, i32
  }
  func.func @transform_6(%arg0: i32) -> (i32, i32) {
    %c0_i32 = arith.constant 0 : i32
    %c0_i32_0 = arith.constant 0 : i32
    %c0_i32_1 = arith.constant 0 : i32
    return %c0_i32, %c0_i32_0 : i32, i32
  }
  func.func @transform_7(%arg0: i32) -> (i32, i32) {
    %c0_i32 = arith.constant 0 : i32
    %c0_i32_0 = arith.constant 0 : i32
    return %arg0, %c0_i32 : i32, i32
  }
}

</mosaic_0001>

<llo_original>
// kernel: tpu_custom_call.1
$region0: #{tpu_custom_call.1}
  #allocation0 [shape = 'u32[]', space=smem, size = 0x4, offset = 0x4, fixed_abs, tag = 'smem constant byte address 0x4 - core index']
  #allocation1 [shape = 'u32[72,128]{1,0:T(1,128)}', space=vmem, size = 0x9000, scoped, tag = 'internal scratch']
  %s0 = inlined_call_operand.hbm [shape: f32[16,128], index: 0, kind: input, shape index: {}]
  %s1 = inlined_call_operand.hbm [shape: f32[16,32], index: 1, kind: input, shape index: {}]
  %s2 = inlined_call_operand.vmem [shape: bf16[128,256], index: 2, kind: input, shape index: {}]
  %s3 = inlined_call_operand.vmem [shape: bf16[32,256], index: 3, kind: input, shape index: {}]
  %s4 = inlined_call_operand.vmem [shape: f32[1,256], index: 4, kind: input, shape index: {}]
  %s5 = inlined_call_operand.vmem [shape: bf16[256,32], index: 5, kind: input, shape index: {}]
  %s6 = inlined_call_operand.vmem [shape: f32[1,32], index: 6, kind: input, shape index: {}]
  %s7 = inlined_call_operand.hbm [shape: f32[16,32], index: 7, kind: output, shape index: {}]
  %s8 = sld [smem:[#allocation0]]
  $region46: #{tpu_custom_call.1} parent=0
    _
  %s10 = ssub.s32 1, %s8
  %s11 = scalar_select 0, %s10, %s8
  $region1: #{tpu_custom_call.1} parent=0
    #allocation2 [shape = 'u8[8192]{0}', space=vmem, size = 0x2000, scoped, tag = 'input window, operand 0, single buffered']
    #allocation3 [shape = 's32[1]{0}', space=sflag, size = 0x4, scoped, tag = 'scoped memory for tpu_custom_call.1']
    #allocation4 [shape = 's32[1]{0}', space=sflag, size = 0x4, scoped, tag = 'scoped memory for tpu_custom_call.1']
    #allocation5 [shape = 'u8[8192]{0}', space=vmem, size = 0x2000, scoped, tag = 'input window, operand 1, single buffered']
    #allocation6 [shape = 's32[1]{0}', space=sflag, size = 0x4, scoped, tag = 'scoped memory for tpu_custom_call.1']
    #allocation7 [shape = 'u8[8192]{0}', space=vmem, size = 0x2000, scoped, tag = 'output window, operand 0, single buffered']
    %12 = vsyncpa [#allocation3], 0
    %13 = vsyncpa [#allocation6], 0
    %14 = vsyncpa [#allocation4], 0
    // Predicated region
    $region2: #{tpu_custom_call.1} parent=1 // pred_check
      _
    $region3: #{tpu_custom_call.1} parent=1 // pred_check_branch
      %16 = sbr.rel (0) target = $region5
    $region4: #{tpu_custom_call.1} parent=1 // pred_region
      %18 = vsyncadd [#allocation3], 0
      %s19 = sshll.u32 %s0, 4
      %s20 = int_to_ptr.hbm [resolvable:$true] %s19
      %s21 = sshll.u32 [#allocation2], 4
      %s22 = int_to_ptr.vmem [resolvable:$true] %s21
      %27 = dma.hbm_to_vmem [thread:$0]  %s20, 256, %s22, [#allocation3], 128, 128, 8
    $region5: #{tpu_custom_call.1} parent=1 // pred_fallthru
      _
    // Predicated region
    $region6: #{tpu_custom_call.1} parent=1 // pred_check
      _
    $region7: #{tpu_custom_call.1} parent=1 // pred_check_branch
      %29 = sbr.rel (0) target = $region9
    $region8: #{tpu_custom_call.1} parent=1 // pred_region
      %31 = vsyncadd [#allocation6], 0
      %s32 = sshll.u32 %s1, 4
      %s33 = int_to_ptr.hbm [resolvable:$true] %s32
      %s34 = sshll.u32 [#allocation5], 4
      %s35 = int_to_ptr.vmem [resolvable:$true] %s34
      %40 = dma.hbm_to_vmem [thread:$0]  %s33, 256, %s35, [#allocation6], 128, 128, 8
    $region9: #{tpu_custom_call.1} parent=1 // pred_fallthru
      _
    // Predicated region
    $region10: #{tpu_custom_call.1} parent=1 // pred_check
      _
    $region11: #{tpu_custom_call.1} parent=1 // pred_check_branch
      %42 = sbr.rel (0) target = $region13
    $region12: #{tpu_custom_call.1} parent=1 // pred_region
      _
    $region13: #{tpu_custom_call.1} parent=1 // pred_fallthru
      _
    // Predicated region
    $region14: #{tpu_custom_call.1} parent=1 // pred_check
      _
    $region15: #{tpu_custom_call.1} parent=1 // pred_check_branch
      %44 = sbr.rel (0) target = $region17
    $region16: #{tpu_custom_call.1} parent=1 // pred_region
      _
    $region17: #{tpu_custom_call.1} parent=1 // pred_fallthru
      _
    // Predicated region
    $region18: #{tpu_custom_call.1} parent=1 // pred_check
      _
    $region19: #{tpu_custom_call.1} parent=1 // pred_check_branch
      %46 = sbr.rel (0) target = $region21
    $region20: #{tpu_custom_call.1} parent=1 // pred_region
      _
    $region21: #{tpu_custom_call.1} parent=1 // pred_fallthru
      _
    // Predicated region
    $region22: #{tpu_custom_call.1} parent=1 // pred_check
      _
    $region23: #{tpu_custom_call.1} parent=1 // pred_check_branch
      %48 = sbr.rel (0) target = $region25
    $region24: #{tpu_custom_call.1} parent=1 // pred_region
      _
    $region25: #{tpu_custom_call.1} parent=1 // pred_fallthru
      _
    // Predicated region
    $region26: #{tpu_custom_call.1} parent=1 // pred_check
      _
    $region27: #{tpu_custom_call.1} parent=1 // pred_check_branch
      %50 = sbr.rel (0) target = $region29
    $region28: #{tpu_custom_call.1} parent=1 // pred_region
      _
    $region29: #{tpu_custom_call.1} parent=1 // pred_fallthru
      _
    // Predicated region
    $region30: #{tpu_custom_call.1} parent=1 // pred_check
      _
    $region31: #{tpu_custom_call.1} parent=1 // pred_check_branch
      %52 = sbr.rel (0) target = $region33
    $region32: #{tpu_custom_call.1} parent=1 // pred_region
      %54 = dma.done [#allocation3], 256
    $region33: #{tpu_custom_call.1} parent=1 // pred_fallthru
      _
    // Predicated region
    $region34: #{tpu_custom_call.1} parent=1 // pred_check
      _
    $region35: #{tpu_custom_call.1} parent=1 // pred_check_branch
      %56 = sbr.rel (0) target = $region37
    $region36: #{tpu_custom_call.1} parent=1 // pred_region
      %58 = dma.done [#allocation6], 256
    $region37: #{tpu_custom_call.1} parent=1 // pred_fallthru
      _
    %v60 = vld [vmem:[#allocation2] sm:$0xff]
    %v61 = vld [vmem:[#allocation2 + $0x8] sm:$0xff]
    %v62 = vpack.c.bf16 %v61, %v60
    %v63 = vld [vmem:[#allocation5] sm:$0xff]
    %v64 = vld [vmem:[#allocation5 + $0x8] sm:$0xff]
    %v65 = vpack.c.bf16 %v64, %v63
    %v66 = vld [vmem:[%s4] sm:$0x3]
    %v67 = vld [vmem:[%s2] sm:$0xff]
    %v68 = vld [vmem:[%s2 + $0x8] sm:$0xff]
    %v69 = vld [vmem:[%s2 + $0x10] sm:$0xff]
    %v70 = vld [vmem:[%s2 + $0x18] sm:$0xff]
    %v71 = vld [vmem:[%s2 + $0x20] sm:$0xff]
    %v72 = vld [vmem:[%s2 + $0x28] sm:$0xff]
    %v73 = vld [vmem:[%s2 + $0x30] sm:$0xff]
    %v74 = vld [vmem:[%s2 + $0x38] sm:$0xff]
    %v75 = vld [vmem:[%s2 + $0x40] sm:$0xff]
    %v76 = vld [vmem:[%s2 + $0x48] sm:$0xff]
    %v77 = vld [vmem:[%s2 + $0x50] sm:$0xff]
    %v78 = vld [vmem:[%s2 + $0x58] sm:$0xff]
    %v79 = vld [vmem:[%s2 + $0x60] sm:$0xff]
    %v80 = vld [vmem:[%s2 + $0x68] sm:$0xff]
    %v81 = vld [vmem:[%s2 + $0x70] sm:$0xff]
    %v82 = vld [vmem:[%s2 + $0x78] sm:$0xff]
    %v99 = vunpack.c.l.b16 %v67
    %v100 = vunpack.c.h.b16 %v67
    %v101 = vunpack.c.l.b16 %v68
    %v102 = vunpack.c.h.b16 %v68
    %v103 = vunpack.c.l.b16 %v69
    %v104 = vunpack.c.h.b16 %v69
    %v105 = vunpack.c.l.b16 %v70
    %v106 = vunpack.c.h.b16 %v70
    %v107 = vunpack.c.l.b16 %v71
    %v108 = vunpack.c.h.b16 %v71
    %v109 = vunpack.c.l.b16 %v72
    %v110 = vunpack.c.h.b16 %v72
    %v111 = vunpack.c.l.b16 %v73
    %v112 = vunpack.c.h.b16 %v73
    %v113 = vunpack.c.l.b16 %v74
    %v114 = vunpack.c.h.b16 %v74
    %v115 = vunpack.c.l.b16 %v75
    %v116 = vunpack.c.h.b16 %v75
    %v117 = vunpack.c.l.b16 %v76
    %v118 = vunpack.c.h.b16 %v76
    %v119 = vunpack.c.l.b16 %v77
    %v120 = vunpack.c.h.b16 %v77
    %v121 = vunpack.c.l.b16 %v78
    %v122 = vunpack.c.h.b16 %v78
    %v123 = vunpack.c.l.b16 %v79
    %v124 = vunpack.c.h.b16 %v79
    %v125 = vunpack.c.l.b16 %v80
    %v126 = vunpack.c.h.b16 %v80
    %v127 = vunpack.c.l.b16 %v81
    %v128 = vunpack.c.h.b16 %v81
    %v129 = vunpack.c.l.b16 %v82
    %v130 = vunpack.c.h.b16 %v82
    %v131 = vpack.c.b16 %v101, %v99
    %v132 = vpack.c.b16 %v102, %v100
    %v133 = vpack.c.b16 %v105, %v103
    %v134 = vpack.c.b16 %v106, %v104
    %v135 = vpack.c.b16 %v109, %v107
    %v136 = vpack.c.b16 %v110, %v108
    %v137 = vpack.c.b16 %v113, %v111
    %v138 = vpack.c.b16 %v114, %v112
    %v139 = vpack.c.b16 %v117, %v115
    %v140 = vpack.c.b16 %v118, %v116
    %v141 = vpack.c.b16 %v121, %v119
    %v142 = vpack.c.b16 %v122, %v120
    %v143 = vpack.c.b16 %v125, %v123
    %v144 = vpack.c.b16 %v126, %v124
    %v145 = vpack.c.b16 %v129, %v127
    %v146 = vpack.c.b16 %v130, %v128
    %163 = vmatpush.bf16.msra.mxu0 %v145
    %164 = vmatpush.bf16.msra.mxu0 %v143
    %165 = vmatpush.bf16.msra.mxu0 %v141
    %166 = vmatpush.bf16.msra.mxu0 %v139
    %167 = vmatpush.bf16.msra.mxu0 %v137
    %168 = vmatpush.bf16.msra.mxu0 %v135
    %169 = vmatpush.bf16.msra.mxu0 %v133
    %170 = vmatpush.bf16.msra.mxu0 %v131
    %171 = vmatmul.bf16.gmra.mxu0 %v62
    %v172 = vpop.f32.mrf.mxu0
    %v173 = vadd.f32 0.0, %v172
    %v174 = vpop.f32.mrf.mxu0
    %v175 = vadd.f32 0.0, %v174
    %176 = vdwg.mxu0
    %177 = vmatpush.bf16.msra.mxu0 %v146
    %178 = vmatpush.bf16.msra.mxu0 %v144
    %179 = vmatpush.bf16.msra.mxu0 %v142
    %180 = vmatpush.bf16.msra.mxu0 %v140
    %181 = vmatpush.bf16.msra.mxu0 %v138
    %182 = vmatpush.bf16.msra.mxu0 %v136
    %183 = vmatpush.bf16.msra.mxu0 %v134
    %184 = vmatpush.bf16.msra.mxu0 %v132
    %185 = vmatmul.bf16.gmra.mxu0 %v62
    %v186 = vpop.f32.mrf.mxu0
    %v187 = vadd.f32 0.0, %v186
    %v188 = vpop.f32.mrf.mxu0
    %v189 = vadd.f32 0.0, %v188
    %190 = vdwg.mxu0
    %v192 = vperm.slane %v66, 0
    %v193 = vperm.slane %v66, 1
    %v196 = vadd.f32 %v192, %v173
    %v197 = vadd.f32 %v193, %v187
    %v198 = vadd.f32 %v192, %v175
    %v199 = vadd.f32 %v193, %v189
    %v200 = vld [vmem:[%s3] sm:$0xff]
    %v201 = vld [vmem:[%s3 + $0x8] sm:$0xff]
    %v202 = vld [vmem:[%s3 + $0x10] sm:$0xff]
    %v203 = vld [vmem:[%s3 + $0x18] sm:$0xff]
    %v208 = vunpack.c.l.b16 %v200
    %v209 = vunpack.c.h.b16 %v200
    %v210 = vunpack.c.l.b16 %v201
    %v211 = vunpack.c.h.b16 %v201
    %v212 = vunpack.c.l.b16 %v202
    %v213 = vunpack.c.h.b16 %v202
    %v214 = vunpack.c.l.b16 %v203
    %v215 = vunpack.c.h.b16 %v203
    %v216 = vpack.c.b16 %v210, %v208
    %v217 = vpack.c.b16 %v211, %v209
    %v218 = vpack.c.b16 %v214, %v212
    %v219 = vpack.c.b16 %v215, %v213
    %vm224 = vcmask 261120
    %v226 = vsel %vm224, %v65, 0
    %228 = vmatpush.bf16.msra.mxu0 0
    %229 = vmatpush.bf16.msra.mxu0 0
    %230 = vmatpush.bf16.msra.mxu0 0
    %231 = vmatpush.bf16.msra.mxu0 0
    %232 = vmatpush.bf16.msra.mxu0 0
    %233 = vmatpush.bf16.msra.mxu0 0
    %234 = vmatpush.bf16.msra.mxu0 %v218
    %235 = vmatpush.bf16.msra.mxu0 %v216
    %236 = vmatmul.bf16.gmra.mxu0 %v226
    %v237 = vpop.f32.mrf.mxu0
    %v238 = vadd.f32 0.0, %v237
    %v239 = vpop.f32.mrf.mxu0
    %v240 = vadd.f32 0.0, %v239
    %241 = vdwg.mxu0
    %242 = vmatpush.bf16.msra.mxu0 0
    %243 = vmatpush.bf16.msra.mxu0 0
    %244 = vmatpush.bf16.msra.mxu0 0
    %245 = vmatpush.bf16.msra.mxu0 0
    %246 = vmatpush.bf16.msra.mxu0 0
    %247 = vmatpush.bf16.msra.mxu0 0
    %248 = vmatpush.bf16.msra.mxu0 %v219
    %249 = vmatpush.bf16.msra.mxu0 %v217
    %250 = vmatmul.bf16.gmra.mxu0 %v226
    %v251 = vpop.f32.mrf.mxu0
    %v252 = vadd.f32 0.0, %v251
    %v253 = vpop.f32.mrf.mxu0
    %v254 = vadd.f32 0.0, %v253
    %255 = vdwg.mxu0
    %v256 = vadd.f32 %v196, %v238
    %v257 = vadd.f32 %v197, %v252
    %v258 = vadd.f32 %v198, %v240
    %v259 = vadd.f32 %v199, %v254
    %v260 = vmax.f32 %v256, 0.0
    %v261 = vmax.f32 %v257, 0.0
    %v262 = vmax.f32 %v258, 0.0
    %v263 = vmax.f32 %v259, 0.0
    %v264 = vpack.c.bf16 %v262, %v260
    %v265 = vpack.c.bf16 %v263, %v261
    %v266 = vld [vmem:[%s6] sm:$0x1]
    %v267 = vld [vmem:[%s5] sm:$0xf]
    %v268 = vld [vmem:[%s5 + $0x4] sm:$0xf]
    %v269 = vld [vmem:[%s5 + $0x8] sm:$0xf]
    %v270 = vld [vmem:[%s5 + $0xc] sm:$0xf]
    %v271 = vld [vmem:[%s5 + $0x10] sm:$0xf]
    %v272 = vld [vmem:[%s5 + $0x14] sm:$0xf]
    %v273 = vld [vmem:[%s5 + $0x18] sm:$0xf]
    %v274 = vld [vmem:[%s5 + $0x1c] sm:$0xf]
    %v275 = vld [vmem:[%s5 + $0x20] sm:$0xf]
    %v276 = vld [vmem:[%s5 + $0x24] sm:$0xf]
    %v277 = vld [vmem:[%s5 + $0x28] sm:$0xf]
    %v278 = vld [vmem:[%s5 + $0x2c] sm:$0xf]
    %v279 = vld [vmem:[%s5 + $0x30] sm:$0xf]
    %v280 = vld [vmem:[%s5 + $0x34] sm:$0xf]
    %v281 = vld [vmem:[%s5 + $0x38] sm:$0xf]
    %v282 = vld [vmem:[%s5 + $0x3c] sm:$0xf]
    %v283 = vld [vmem:[%s5 + $0x40] sm:$0xf]
    %v284 = vld [vmem:[%s5 + $0x44] sm:$0xf]
    %v285 = vld [vmem:[%s5 + $0x48] sm:$0xf]
    %v286 = vld [vmem:[%s5 + $0x4c] sm:$0xf]
    %v287 = vld [vmem:[%s5 + $0x50] sm:$0xf]
    %v288 = vld [vmem:[%s5 + $0x54] sm:$0xf]
    %v289 = vld [vmem:[%s5 + $0x58] sm:$0xf]
    %v290 = vld [vmem:[%s5 + $0x5c] sm:$0xf]
    %v291 = vld [vmem:[%s5 + $0x60] sm:$0xf]
    %v292 = vld [vmem:[%s5 + $0x64] sm:$0xf]
    %v293 = vld [vmem:[%s5 + $0x68] sm:$0xf]
    %v294 = vld [vmem:[%s5 + $0x6c] sm:$0xf]
    %v295 = vld [vmem:[%s5 + $0x70] sm:$0xf]
    %v296 = vld [vmem:[%s5 + $0x74] sm:$0xf]
    %v297 = vld [vmem:[%s5 + $0x78] sm:$0xf]
    %v298 = vld [vmem:[%s5 + $0x7c] sm:$0xf]
    %v331 = vunpack.c.l.b16 %v267
    %v332 = vunpack.c.l.b16 %v268
    %v333 = vunpack.c.l.b16 %v269
    %v334 = vunpack.c.l.b16 %v270
    %v335 = vunpack.c.l.b16 %v271
    %v336 = vunpack.c.l.b16 %v272
    %v337 = vunpack.c.l.b16 %v273
    %v338 = vunpack.c.l.b16 %v274
    %v339 = vunpack.c.l.b16 %v275
    %v340 = vunpack.c.l.b16 %v276
    %v341 = vunpack.c.l.b16 %v277
    %v342 = vunpack.c.l.b16 %v278
    %v343 = vunpack.c.l.b16 %v279
    %v344 = vunpack.c.l.b16 %v280
    %v345 = vunpack.c.l.b16 %v281
    %v346 = vunpack.c.l.b16 %v282
    %v347 = vunpack.c.l.b16 %v283
    %v348 = vunpack.c.l.b16 %v284
    %v349 = vunpack.c.l.b16 %v285
    %v350 = vunpack.c.l.b16 %v286
    %v351 = vunpack.c.l.b16 %v287
    %v352 = vunpack.c.l.b16 %v288
    %v353 = vunpack.c.l.b16 %v289
    %v354 = vunpack.c.l.b16 %v290
    %v355 = vunpack.c.l.b16 %v291
    %v356 = vunpack.c.l.b16 %v292
    %v357 = vunpack.c.l.b16 %v293
    %v358 = vunpack.c.l.b16 %v294
    %v359 = vunpack.c.l.b16 %v295
    %v360 = vunpack.c.l.b16 %v296
    %v361 = vunpack.c.l.b16 %v297
    %v362 = vunpack.c.l.b16 %v298
    %v363 = vpack.c.b16 %v332, %v331
    %v364 = vpack.c.b16 %v334, %v333
    %v365 = vpack.c.b16 %v336, %v335
    %v366 = vpack.c.b16 %v338, %v337
    %v367 = vpack.c.b16 %v340, %v339
    %v368 = vpack.c.b16 %v342, %v341
    %v369 = vpack.c.b16 %v344, %v343
    %v370 = vpack.c.b16 %v346, %v345
    %v371 = vpack.c.b16 %v348, %v347
    %v372 = vpack.c.b16 %v350, %v349
    %v373 = vpack.c.b16 %v352, %v351
    %v374 = vpack.c.b16 %v354, %v353
    %v375 = vpack.c.b16 %v356, %v355
    %v376 = vpack.c.b16 %v358, %v357
    %v377 = vpack.c.b16 %v360, %v359
    %v378 = vpack.c.b16 %v362, %v361
    %395 = vmatpush.bf16.msra.mxu0 %v370
    %396 = vmatpush.bf16.msra.mxu0 %v369
    %397 = vmatpush.bf16.msra.mxu0 %v368
    %398 = vmatpush.bf16.msra.mxu0 %v367
    %399 = vmatpush.bf16.msra.mxu0 %v366
    %400 = vmatpush.bf16.msra.mxu0 %v365
    %401 = vmatpush.bf16.msra.mxu0 %v364
    %402 = vmatpush.bf16.msra.mxu0 %v363
    %403 = vmatmul.bf16.gmra.mxu0 %v264
    %v404 = vpop.f32.mrf.mxu0
    %v405 = vadd.f32 0.0, %v404
    %v406 = vpop.f32.mrf.mxu0
    %v407 = vadd.f32 0.0, %v406
    %408 = vdwg.mxu0
    %409 = vmatpush.bf16.msra.mxu0 %v378
    %410 = vmatpush.bf16.msra.mxu0 %v377
    %411 = vmatpush.bf16.msra.mxu0 %v376
    %412 = vmatpush.bf16.msra.mxu0 %v375
    %413 = vmatpush.bf16.msra.mxu0 %v374
    %414 = vmatpush.bf16.msra.mxu0 %v373
    %415 = vmatpush.bf16.msra.mxu0 %v372
    %416 = vmatpush.bf16.msra.mxu0 %v371
    %417 = vmatmul.bf16.gmra.mxu0 %v265
    %v418 = vpop.f32.mrf.mxu0
    %v419 = vadd.f32 %v405, %v418
    %v420 = vpop.f32.mrf.mxu0
    %v421 = vadd.f32 %v407, %v420
    %422 = vdwg.mxu0
    %v424 = vperm.slane %v266, 0
    %v426 = vadd.f32 %v424, %v419
    %v427 = vadd.f32 %v424, %v421
    %428 = vst.msk [vmem:[#allocation7] sm:$0xff] %vm224, %v426
    %429 = vst.msk [vmem:[#allocation7 + $0x8] sm:$0xff] %vm224, %v427
    // Predicated region
    $region38: #{tpu_custom_call.1} parent=1 // pred_check
      _
    $region39: #{tpu_custom_call.1} parent=1 // pred_check_branch
      %431 = sbr.rel (0) target = $region41
    $region40: #{tpu_custom_call.1} parent=1 // pred_region
      %433 = vsyncadd [#allocation4], 0
      %s434 = sshll.u32 [#allocation7], 4
      %s435 = int_to_ptr.vmem [resolvable:$true] %s434
      %s436 = sshll.u32 %s7, 4
      %s437 = int_to_ptr.hbm [resolvable:$true] %s436
      %442 = dma.vmem_to_hbm [thread:$0]  %s435, 256, %s437, [#allocation4], 128, 128, 8
    $region41: #{tpu_custom_call.1} parent=1 // pred_fallthru
      _
    // Predicated region
    $region42: #{tpu_custom_call.1} parent=1 // pred_check
      _
    $region43: #{tpu_custom_call.1} parent=1 // pred_check_branch
      %444 = sbr.rel (0) target = $region45
    $region44: #{tpu_custom_call.1} parent=1 // pred_region
      %446 = dma.done [#allocation4], 256
    $region45: #{tpu_custom_call.1} parent=1 // pred_fallthru
      _
    %447 = vsyncpa [#allocation3], 1
    %448 = vsyncpa [#allocation6], 1
    %449 = vsyncpa [#allocation4], 1

</llo_original>
